<compile_context>
chip_gen: v6e
topology: v6e:2x2x1
jax: 0.10.0
libtpu: 0.0.40
codegen_flags: <defaults>
</compile_context>

<pallas_src>
import functools

import jax
import jax.numpy as jnp
from jax import lax
from jax.experimental import pallas as pl
from jax.experimental.pallas import tpu as pltpu

LAMB_COORD = 5.0
LAMB_NOOBJ = 0.5
NUM_CH = 30


def _yolov1_loss_kernel(pred_ref, gt_ref, out_ref, *, batch):
    """pred_ref / gt_ref: (TB, 30, CELLS) blocks (channels on sublanes, cells
    on lanes).  out_ref: (1,) f32 SMEM accumulator, resident across the grid."""
    step = pl.program_id(0)

    @pl.when(step == 0)
    def _init():
        out_ref[0] = 0.0

    p = pred_ref[...].astype(jnp.float32)              # (TB, 30, C)
    g = gt_ref[...].astype(jnp.float32)

    # Static per-channel weights built on the sublane (channel) axis.
    ch = lax.broadcasted_iota(jnp.int32, (1, NUM_CH, 1), 1)
    is_conf = (ch == 4) | (ch == 9)
    is_wh = (ch == 2) | (ch == 3) | (ch == 7) | (ch == 8)
    is_coord = (ch <= 8) & jnp.logical_not(is_conf)    # xy + wh: 0-3, 5-8
    # effective weight = w_noobj[c] + obj(cell) * w_obj[c]
    #   coord: 5*obj      conf: 0.5 + 0.5*obj      cls: 1*obj
    w_obj = jnp.where(is_coord, LAMB_COORD,
                      jnp.where(is_conf, 1.0 - LAMB_NOOBJ, 1.0)).astype(jnp.float32)
    w_noobj = jnp.where(is_conf, LAMB_NOOBJ, 0.0).astype(jnp.float32)

    # Object mask from gt confidence channel 4 (exact ==1, as in PyTorch).
    obj = (g[:, 4:5, :] == 1.0).astype(jnp.float32)    # (TB, 1, C)

    # Single fused diff: sqrt-space on w/h channels of object cells, plain
    # difference everywhere else.  The sqrt is guarded so non-object cells
    # cannot inject NaN (PyTorch only ever sqrt's gathered object cells).
    plain = p - g
    wh_mask = is_wh & (obj > 0.0)                      # (TB, 30, C)
    sq = jnp.sqrt(jnp.where(wh_mask, p, 0.0)) - jnp.sqrt(jnp.where(wh_mask, g, 0.0))
    diff = jnp.where(is_wh, sq, plain)

    w = w_noobj + obj * w_obj                          # (TB, 30, C)
    out_ref[0] += jnp.sum(diff * diff * w)             # one reduce per tile

    @pl.when(step == pl.num_programs(0) - 1)
    def _finalize():
        out_ref[0] = out_ref[0] / batch


def _pick_batch_tile(b, n_cells, bytes_per_elem, budget_bytes=1 << 20):
    """Largest divisor of b whose (tb, 30, n_cells) block stays <= budget per
    input per pipeline buffer; prefer >= 2 grid steps so the DMA pipeline has
    something to overlap."""
    per_batch = NUM_CH * n_cells * bytes_per_elem
    tb = max(1, min(b, budget_bytes // max(per_batch, 1)))
    if b >= 2:
        tb = min(tb, max(1, b // 2))
    while b % tb:
        tb -= 1
    return tb


def yolov1_loss(pred_nchw, gt_nchw):
    """pred_nchw, gt_nchw: (B, 30, S, S). Returns scalar f32 loss."""
    b, c, s1, s2 = pred_nchw.shape
    assert c == NUM_CH
    n_cells = s1 * s2
    # Free view of NCHW (no transpose, no extra HBM round trip).
    pred3d = pred_nchw.reshape(b, c, n_cells)
    gt3d = gt_nchw.reshape(b, c, n_cells)

    bytes_per_elem = max(pred3d.dtype.itemsize, gt3d.dtype.itemsize)
    tb = _pick_batch_tile(b, n_cells, bytes_per_elem)
    grid = (b // tb,)

    # NOTE: on multi-TensorCore parts (v7x) the batch axis could additionally
    # be split with "parallel" semantics + per-core partial sums; kept
    # single-accumulator here for portability/simplicity (kernel is tiny).
    out = pl.pallas_call(
        functools.partial(_yolov1_loss_kernel, batch=float(b)),
        out_shape=jax.ShapeDtypeStruct((1,), jnp.float32),
        grid_spec=pltpu.PrefetchScalarGridSpec(
            num_scalar_prefetch=0,
            grid=grid,
            in_specs=[
                pl.BlockSpec((tb, c, n_cells), lambda i: (i, 0, 0)),
                pl.BlockSpec((tb, c, n_cells), lambda i: (i, 0, 0)),
            ],
            out_specs=pl.BlockSpec((1,), lambda i: (0,),
                                   memory_space=pltpu.SMEM),
        ),
        compiler_params=pltpu.CompilerParams(
            dimension_semantics=("arbitrary",)),
    )(pred3d, gt3d)
    return out[0]


def _reference_loss(pred_nchw, gt_nchw):
    """Pure-JAX reference mirroring the PyTorch module (masked-sum form)."""
    b = pred_nchw.shape[0]
    p = jnp.transpose(pred_nchw, (0, 2, 3, 1)).astype(jnp.float32)
    g = jnp.transpose(gt_nchw, (0, 2, 3, 1)).astype(jnp.float32)
    obj = (g[..., 4] == 1.0).astype(jnp.float32)[..., None]
    noobj = 1.0 - obj
    d2 = (p - g) ** 2
    xy = jnp.sum(d2[..., (0, 1, 5, 6)] * obj)
    pw = jnp.where(obj > 0, p[..., (2, 3, 7, 8)], 0.0)
    gw = jnp.where(obj > 0, g[..., (2, 3, 7, 8)], 0.0)
    wh = jnp.sum(((jnp.sqrt(pw) - jnp.sqrt(gw)) ** 2) * obj)
    conf_d2 = d2[..., (4, 9)]
    conf = jnp.sum(conf_d2 * obj) + LAMB_NOOBJ * jnp.sum(conf_d2 * noobj)
    cls = jnp.sum(d2[..., 10:30] * obj)
    return (LAMB_COORD * (xy + wh) + conf + cls) / b


if __name__ == "__main__":
    key = jax.random.PRNGKey(0)
    k_pred, k_gt, k_obj = jax.random.split(key, 3)

    B, C, S = 2, 30, 8
    # Values in [0, 1) so sqrt of w/h channels is real (as in real YOLO targets).
    pred = jax.random.uniform(k_pred, (B, C, S, S), dtype=jnp.float32)
    gt = jax.random.uniform(k_gt, (B, C, S, S), dtype=jnp.float32)
    # Make the gt confidence channel an exact 0/1 object indicator.
    obj_map = (jax.random.uniform(k_obj, (B, S, S)) < 0.3).astype(jnp.float32)
    gt = gt.at[:, 4, :, :].set(obj_map)

    loss = jax.block_until_ready(yolov1_loss(pred, gt))
    ref = jax.block_until_ready(_reference_loss(pred, gt))
    assert jnp.allclose(loss, ref, rtol=1e-4, atol=1e-4), (loss, ref)

    print("KERNEL_OK")
</pallas_src>

<mosaic_0001>
module attributes {stable_mosaic.version = 11 : i64} {
  func.func @_yolov1_loss_kernel(%arg0: i32, %arg1: memref<1x30x64xf32, #tpu.memory_space<vmem>>, %arg2: memref<1x30x64xf32, #tpu.memory_space<vmem>>, %arg3: memref<1xf32, #tpu.memory_space<smem>>) attributes {dimension_semantics = [#tpu.dimension_semantics<arbitrary>], iteration_bounds = array<i64: 2>, scalar_prefetch = 0 : i64, scratch_operands = 0 : i64, tpu.core_type = #tpu.core_type<tc>, window_params = [{transform_indices = @transform_0, window_bounds = array<i64: 1, 30, 64>}, {transform_indices = @transform_1, window_bounds = array<i64: 1, 30, 64>}, {transform_indices = @transform_2, window_bounds = array<i64: 1>}]} {
    %c0_i32 = arith.constant 0 : i32
    %0 = arith.cmpi eq, %arg0, %c0_i32 : i32
    %1 = arith.extui %0 : i1 to i32
    %c0_i32_0 = arith.constant 0 : i32
    %2 = arith.cmpi ne, %1, %c0_i32_0 : i32
    scf.if %2 {
      %cst_20 = arith.constant 0.000000e+00 : f32
      %c0_21 = arith.constant 0 : index
      %72 = memref.load %arg3[%c0_21] : memref<1xf32, #tpu.memory_space<smem>>
      memref.store %cst_20, %arg3[%c0_21] : memref<1xf32, #tpu.memory_space<smem>>
    } else {
    }
    %c0 = arith.constant 0 : index
    %c0_1 = arith.constant 0 : index
    %c0_2 = arith.constant 0 : index
    %3 = vector.load %arg1[%c0, %c0_1, %c0_2] : memref<1x30x64xf32, #tpu.memory_space<vmem>>, vector<1x30x64xf32>
    %c0_3 = arith.constant 0 : index
    %c0_4 = arith.constant 0 : index
    %c0_5 = arith.constant 0 : index
    %4 = vector.load %arg2[%c0_3, %c0_4, %c0_5] : memref<1x30x64xf32, #tpu.memory_space<vmem>>, vector<1x30x64xf32>
    %5 = tpu.iota {dimensions = array<i32: 1>} : vector<1x30x1xi32>
    %c4_i32 = arith.constant 4 : i32
    %6 = vector.broadcast %c4_i32 : i32 to vector<1x30x1xi32>
    %7 = arith.cmpi eq, %5, %6 : vector<1x30x1xi32>
    %c9_i32 = arith.constant 9 : i32
    %8 = vector.broadcast %c9_i32 : i32 to vector<1x30x1xi32>
    %9 = arith.cmpi eq, %5, %8 : vector<1x30x1xi32>
    %10 = arith.ori %7, %9 : vector<1x30x1xi1>
    %c2_i32 = arith.constant 2 : i32
    %11 = vector.broadcast %c2_i32 : i32 to vector<1x30x1xi32>
    %12 = arith.cmpi eq, %5, %11 : vector<1x30x1xi32>
    %c3_i32 = arith.constant 3 : i32
    %13 = vector.broadcast %c3_i32 : i32 to vector<1x30x1xi32>
    %14 = arith.cmpi eq, %5, %13 : vector<1x30x1xi32>
    %15 = arith.ori %12, %14 : vector<1x30x1xi1>
    %c7_i32 = arith.constant 7 : i32
    %16 = vector.broadcast %c7_i32 : i32 to vector<1x30x1xi32>
    %17 = arith.cmpi eq, %5, %16 : vector<1x30x1xi32>
    %18 = arith.ori %15, %17 : vector<1x30x1xi1>
    %c8_i32 = arith.constant 8 : i32
    %19 = vector.broadcast %c8_i32 : i32 to vector<1x30x1xi32>
    %20 = arith.cmpi eq, %5, %19 : vector<1x30x1xi32>
    %21 = arith.ori %18, %20 : vector<1x30x1xi1>
    %c8_i32_6 = arith.constant 8 : i32
    %22 = vector.broadcast %c8_i32_6 : i32 to vector<1x30x1xi32>
    %23 = arith.cmpi sle, %5, %22 : vector<1x30x1xi32>
    %cst = arith.constant dense<true> : vector<1x30x1xi1>
    %24 = arith.xori %10, %cst : vector<1x30x1xi1>
    %25 = arith.andi %23, %24 : vector<1x30x1xi1>
    %cst_7 = arith.constant 5.000000e-01 : f32
    %cst_8 = arith.constant 1.000000e+00 : f32
    %26 = vector.broadcast %cst_7 : f32 to vector<1x30x1xf32>
    %27 = vector.broadcast %cst_8 : f32 to vector<1x30x1xf32>
    %28 = arith.select %10, %26, %27 : vector<1x30x1xi1>, vector<1x30x1xf32>
    %cst_9 = arith.constant 5.000000e+00 : f32
    %29 = vector.broadcast %cst_9 : f32 to vector<1x30x1xf32>
    %30 = arith.select %25, %29, %28 : vector<1x30x1xi1>, vector<1x30x1xf32>
    %cst_10 = arith.constant 5.000000e-01 : f32
    %cst_11 = arith.constant 0.000000e+00 : f32
    %31 = vector.broadcast %cst_10 : f32 to vector<1x30x1xf32>
    %32 = vector.broadcast %cst_11 : f32 to vector<1x30x1xf32>
    %33 = arith.select %10, %31, %32 : vector<1x30x1xi1>, vector<1x30x1xf32>
    %34 = vector.extract_strided_slice %4 {offsets = [0, 4, 0], sizes = [1, 1, 64], strides = [1, 1, 1]} : vector<1x30x64xf32> to vector<1x1x64xf32>
    %cst_12 = arith.constant 1.000000e+00 : f32
    %35 = vector.broadcast %cst_12 : f32 to vector<1x1x64xf32>
    %36 = arith.cmpf oeq, %34, %35 : vector<1x1x64xf32>
    %37 = arith.extui %36 : vector<1x1x64xi1> to vector<1x1x64xi32>
    %38 = arith.sitofp %37 : vector<1x1x64xi32> to vector<1x1x64xf32>
    %39 = arith.subf %3, %4 : vector<1x30x64xf32>
    %cst_13 = arith.constant 0.000000e+00 : f32
    %40 = vector.broadcast %cst_13 : f32 to vector<1x1x64xf32>
    %41 = arith.cmpf ogt, %38, %40 : vector<1x1x64xf32>
    %42 = vector.broadcast %21 : vector<1x30x1xi1> to vector<1x30x64xi1>
    %43 = vector.broadcast %41 : vector<1x1x64xi1> to vector<1x30x64xi1>
    %44 = arith.andi %42, %43 : vector<1x30x64xi1>
    %cst_14 = arith.constant 0.000000e+00 : f32
    %45 = vector.broadcast %cst_14 : f32 to vector<1x30x64xf32>
    %46 = arith.select %44, %3, %45 : vector<1x30x64xi1>, vector<1x30x64xf32>
    %47 = math.sqrt %46 : vector<1x30x64xf32>
    %cst_15 = arith.constant 0.000000e+00 : f32
    %48 = vector.broadcast %cst_15 : f32 to vector<1x30x64xf32>
    %49 = arith.select %44, %4, %48 : vector<1x30x64xi1>, vector<1x30x64xf32>
    %50 = math.sqrt %49 : vector<1x30x64xf32>
    %51 = arith.subf %47, %50 : vector<1x30x64xf32>
    %52 = vector.shape_cast %21 : vector<1x30x1xi1> to vector<1x30x1xi1>
    %53 = vector.broadcast %52 : vector<1x30x1xi1> to vector<1x30x64xi1>
    %54 = arith.select %53, %51, %39 : vector<1x30x64xi1>, vector<1x30x64xf32>
    %55 = vector.broadcast %38 : vector<1x1x64xf32> to vector<1x30x64xf32>
    %56 = vector.broadcast %30 : vector<1x30x1xf32> to vector<1x30x64xf32>
    %57 = arith.mulf %55, %56 : vector<1x30x64xf32>
    %58 = vector.broadcast %33 : vector<1x30x1xf32> to vector<1x30x64xf32>
    %59 = arith.addf %58, %57 : vector<1x30x64xf32>
    %c0_16 = arith.constant 0 : index
    %60 = memref.load %arg3[%c0_16] : memref<1xf32, #tpu.memory_space<smem>>
    %61 = arith.mulf %54, %54 : vector<1x30x64xf32>
    %62 = arith.mulf %61, %59 : vector<1x30x64xf32>
    %63 = vector.shape_cast %62 : vector<1x30x64xf32> to vector<1x1x30x64xf32>
    %cst_17 = arith.constant dense<0.000000e+00> : vector<1xf32>
    %64 = vector.multi_reduction <add>, %63, %cst_17 [1, 2, 3] : vector<1x1x30x64xf32> to vector<1xf32>
    %65 = vector.shape_cast %64 : vector<1xf32> to vector<1x1x1x1xf32>
    %66 = vector.extract %65[0, 0, 0, 0] : f32 from vector<1x1x1x1xf32>
    %67 = arith.addf %60, %66 : f32
    %c0_18 = arith.constant 0 : index
    %68 = memref.load %arg3[%c0_18] : memref<1xf32, #tpu.memory_space<smem>>
    memref.store %67, %arg3[%c0_18] : memref<1xf32, #tpu.memory_space<smem>>
    %c1_i32 = arith.constant 1 : i32
    %69 = arith.cmpi eq, %arg0, %c1_i32 : i32
    %70 = arith.extui %69 : i1 to i32
    %c0_i32_19 = arith.constant 0 : i32
    %71 = arith.cmpi ne, %70, %c0_i32_19 : i32
    scf.if %71 {
      %c0_20 = arith.constant 0 : index
      %72 = memref.load %arg3[%c0_20] : memref<1xf32, #tpu.memory_space<smem>>
      %cst_21 = arith.constant 2.000000e+00 : f32
      %73 = arith.divf %72, %cst_21 : f32
      %c0_22 = arith.constant 0 : index
      %74 = memref.load %arg3[%c0_22] : memref<1xf32, #tpu.memory_space<smem>>
      memref.store %73, %arg3[%c0_22] : memref<1xf32, #tpu.memory_space<smem>>
    } else {
    }
    return
  }
  func.func @transform_0(%arg0: i32) -> (i32, i32, i32) {
    %c0_i32 = arith.constant 0 : i32
    %c0_i32_0 = arith.constant 0 : i32
    %c0_i32_1 = arith.constant 0 : i32
    return %arg0, %c0_i32, %c0_i32_0 : i32, i32, i32
  }
  func.func @transform_1(%arg0: i32) -> (i32, i32, i32) {
    %c0_i32 = arith.constant 0 : i32
    %c0_i32_0 = arith.constant 0 : i32
    %c0_i32_1 = arith.constant 0 : i32
    return %arg0, %c0_i32, %c0_i32_0 : i32, i32, i32
  }
  func.func @transform_2(%arg0: i32) -> i32 {
    %c0_i32 = arith.constant 0 : i32
    %c0_i32_0 = arith.constant 0 : i32
    return %c0_i32 : i32
  }
}

</mosaic_0001>

<llo_original>
// kernel: tpu_custom_call.1
$region0: #{tpu_custom_call.1}
  #allocation0 [shape = 'u32[]', space=smem, size = 0x4, offset = 0x4, fixed_abs, tag = 'smem constant byte address 0x4 - core index']
  #allocation1 [shape = 'u32[144,128]{1,0:T(1,128)}', space=vmem, size = 0x12000, scoped, tag = 'internal scratch']
  %s0 = inlined_call_operand.vmem [shape: f32[2,30,64], index: 0, kind: input, shape index: {}]
  %s1 = inlined_call_operand.vmem [shape: f32[2,30,64], index: 1, kind: input, shape index: {}]
  %s2 = inlined_call_operand.hbm [shape: f32[1], index: 2, kind: output, shape index: {}]
  %s3 = sld [smem:[#allocation0]]
  $region49: #{tpu_custom_call.1} parent=0
    _
  %s5 = ssub.s32 1, %s3
  %s6 = scalar_select 0, %s5, %s3
  $region1: #{tpu_custom_call.1} parent=0
    #allocation2 [shape = 'u8[512]{0}', space=smem, size = 0x200, scoped, tag = 'output window, operand 0, single buffered']
    #allocation3 [shape = 's32[2]{0}', space=sflag, size = 0x8, scoped, tag = 'scoped memory for tpu_custom_call.1']
    %7 = vsyncpa [#allocation3], 0
    loop: start=0, step=1, limit=4
    $region2: #{tpu_custom_call.1} parent=1 // loop_pre_header
      _
    $region3: #{tpu_custom_call.1} parent=1 // loop_header
      %s9 = sphi 0, %s13
      %p10 = scmp.ge.s32.totalorder %s9, 4
      %s19 = sphi 0, %s21
      %s22 = sphi 0, %s19
      %s23 = sphi 0, %s22
      %s39 = sphi 0, %s23
      %s45 = sphi 0, %s47
      %s48 = sphi 0, %s45
      %s49 = sphi 0, %s48
      %s65 = sphi 0, %s49
      %s69 = sphi 0, %s69
      %s71 = sphi 0, %s69
      %s72 = sphi 0, %s71
      %s86 = sphi 0, %s72
    $region4: #{tpu_custom_call.1} parent=1 // loop_header_branch
      %12 = sbr.rel (%p10) target = $region8
    $region5: #{tpu_custom_call.1} parent=1 // loop_body
      %s14 = ssub.s32 %s9, 1
      %s15 = ssub.s32 %s9, 2
      %s16 = sadd.s32 %s9, 1
      %s17 = ssub.s32 %s9, %s16
      %p18 = scmp.eq.s32.totalorder %s17, 0
      %s20 = sadd.s32 %s19, 1
      %s21 = scalar_select %p18, %s19, %s20
      %p24 = pneg %p18
      %p25 = scmp.eq.s32.totalorder %s9, 1
      %p26 = por %p24, %p25
      %p27 = scmp.ne.s32.totalorder %s19, %s22
      %p28 = scmp.eq.s32.totalorder %s9, 0
      %p29 = por %p27, %p28
      %p30 = scmp.ne.s32.totalorder %s19, %s22
      %p31 = scmp.eq.s32.totalorder %s14, 1
      %p32 = por %p30, %p31
      %p33 = scmp.ne.s32.totalorder %s22, %s23
      %p34 = scmp.eq.s32.totalorder %s14, 0
      %p35 = por %p33, %p34
      %p36 = scmp.ne.s32.totalorder %s22, %s23
      %p37 = scmp.eq.s32.totalorder %s15, 1
      %p38 = por %p36, %p37
      %p40 = scmp.ne.s32.totalorder %s23, %s39
      %p41 = scmp.eq.s32.totalorder %s15, 0
      %p42 = por %p40, %p41
      %s43 = ssub.s32 %s9, %s16
      %p44 = scmp.eq.s32.totalorder %s43, 0
      %s46 = sadd.s32 %s45, 1
      %s47 = scalar_select %p44, %s45, %s46
      %p50 = pneg %p44
      %p51 = scmp.eq.s32.totalorder %s9, 1
      %p52 = por %p50, %p51
      %p53 = scmp.ne.s32.totalorder %s45, %s48
      %p54 = scmp.eq.s32.totalorder %s9, 0
      %p55 = por %p53, %p54
      %p56 = scmp.ne.s32.totalorder %s45, %s48
      %p57 = scmp.eq.s32.totalorder %s14, 1
      %p58 = por %p56, %p57
      %p59 = scmp.ne.s32.totalorder %s48, %s49
      %p60 = scmp.eq.s32.totalorder %s14, 0
      %p61 = por %p59, %p60
      %p62 = scmp.ne.s32.totalorder %s48, %s49
      %p63 = scmp.eq.s32.totalorder %s15, 1
      %p64 = por %p62, %p63
      %p66 = scmp.ne.s32.totalorder %s49, %s65
      %p67 = scmp.eq.s32.totalorder %s15, 0
      %p68 = por %p66, %p67
      %s70 = sadd.s32 %s69, 1
      %p73 = scmp.eq.s32.totalorder %s9, 1
      %p74 = scmp.ne.s32.totalorder %s69, %s71
      %p75 = scmp.eq.s32.totalorder %s9, 0
      %p76 = por %p74, %p75
      %p77 = scmp.ne.s32.totalorder %s69, %s71
      %p78 = scmp.eq.s32.totalorder %s14, 1
      %p79 = por %p77, %p78
      %p80 = scmp.ne.s32.totalorder %s71, %s72
      %p81 = scmp.eq.s32.totalorder %s14, 0
      %p82 = por %p80, %p81
      %p83 = scmp.ne.s32.totalorder %s71, %s72
      %p84 = scmp.eq.s32.totalorder %s15, 1
      %p85 = por %p83, %p84
      %p87 = scmp.ne.s32.totalorder %s72, %s86
      %p88 = scmp.eq.s32.totalorder %s15, 0
      %p89 = por %p87, %p88
      %p90 = scmp.le.s32.totalorder 1, %s9
      %p91 = scmp.lt.s32.totalorder %s9, 3
      %p92 = pnand %p90, %p91
      %p93 = pneg %p92
      // Predicated region
      $region9: #{tpu_custom_call.1} parent=5 // pred_check
        _
      $region10: #{tpu_custom_call.1} parent=5 // pred_check_branch
        %95 = sbr.rel (%p92) target = $region12
      $region11: #{tpu_custom_call.1} parent=5 // pred_region
        %s96 = ssub.s32 %s9, 1
      $region12: #{tpu_custom_call.1} parent=5 // pred_fallthru
        _
      %p97 = scmp.lt.s32.totalorder %s9, 2
      // Predicated region
      $region13: #{tpu_custom_call.1} parent=5 // pred_check
        %p98 = pneg %p97
      $region14: #{tpu_custom_call.1} parent=5 // pred_check_branch
        %100 = sbr.rel (%p98) target = $region16
      $region15: #{tpu_custom_call.1} parent=5 // pred_region
        // Predicated region
        $region17: #{tpu_custom_call.1} parent=15 // pred_check
          %p101 = pneg %p29
        $region18: #{tpu_custom_call.1} parent=15 // pred_check_branch
          %103 = sbr.rel (%p101) target = $region20
        $region19: #{tpu_custom_call.1} parent=15 // pred_region
          %p104 = scmp.lt.s32.totalorder %s9, 1
          %s105 = scalar_select %p104, %s9, 1
          %s106 = smul.addr %s105, 4
          %s107 = smul.addr %s106, 8
          %s108 = scalar_lea.vmem %s0, %s107
        $region20: #{tpu_custom_call.1} parent=15 // pred_fallthru
          _
        // Predicated region
        $region21: #{tpu_custom_call.1} parent=15 // pred_check
          %p109 = pneg %p55
        $region22: #{tpu_custom_call.1} parent=15 // pred_check_branch
          %111 = sbr.rel (%p109) target = $region24
        $region23: #{tpu_custom_call.1} parent=15 // pred_region
          %p112 = scmp.lt.s32.totalorder %s9, 1
          %s113 = scalar_select %p112, %s9, 1
          %s114 = smul.addr %s113, 4
          %s115 = smul.addr %s114, 8
          %s116 = scalar_lea.vmem %s1, %s115
        $region24: #{tpu_custom_call.1} parent=15 // pred_fallthru
          _
      $region16: #{tpu_custom_call.1} parent=5 // pred_fallthru
        _
      %p117 = scmp.le.s32.totalorder 1, %s9
      %p118 = scmp.lt.s32.totalorder %s9, 3
      %p119 = pnand %p117, %p118
      %p120 = pneg %p119
      // Predicated region
      $region25: #{tpu_custom_call.1} parent=5 // pred_check
        _
      $region26: #{tpu_custom_call.1} parent=5 // pred_check_branch
        %122 = sbr.rel (%p119) target = $region28
      $region27: #{tpu_custom_call.1} parent=5 // pred_region
        %s123 = ssub.s32 %s9, 1
        %p124 = scmp.lt.s32.totalorder %s14, 1
        %s125 = scalar_select %p124, %s14, 1
        %s126 = smul.addr %s125, 4
        %s127 = smul.addr %s126, 8
        %s128 = scalar_lea.vmem %s0, %s127
        %p129 = pneg %p35
        %p130 = pneg %p32
        %p131 = scmp.lt.s32.totalorder %s14, 1
        %s132 = scalar_select %p131, %s14, 1
        %s133 = smul.addr %s132, 4
        %s134 = smul.addr %s133, 8
        %s135 = scalar_lea.vmem %s1, %s134
        %p136 = pneg %p61
        %p137 = pneg %p58
        %p138 = pneg %p82
        %p139 = pneg %p79
        %p140 = scmp.lt.s32.totalorder %s14, 1
        %s141 = scalar_select %p140, %s14, 1
        %s142 = smul.addr %s141, 4
        %s143 = smul.addr %s142, 8
        %s144 = scalar_lea.vmem %s0, %s143
        %p145 = scmp.lt.s32.totalorder %s14, 1
        %s146 = scalar_select %p145, %s14, 1
        %s147 = smul.addr %s146, 4
        %s148 = smul.addr %s147, 8
        %s149 = scalar_lea.vmem %s1, %s148
        %p150 = scmp.eq.s32.totalorder %s14, 0
        // Predicated region
        $region29: #{tpu_custom_call.1} parent=27 // pred_check
          %p151 = pneg %p150
        $region30: #{tpu_custom_call.1} parent=27 // pred_check_branch
          %153 = sbr.rel (%p151) target = $region32
        $region31: #{tpu_custom_call.1} parent=27 // pred_region
          %s154 = scalar_lea.smem [#allocation2], 0
          %155 = sst [smem:[%s154]] 0.0
        $region32: #{tpu_custom_call.1} parent=27 // pred_fallthru
          _
        %v156 = vld [vmem:[%s144] sm:$0xff]
        %v157 = vld [vmem:[%s144 + $0x8] sm:$0xff]
        %v158 = vld [vmem:[%s144 + $0x10] sm:$0xff]
        %v159 = vld [vmem:[%s144 + $0x18] sm:$0x3f]
        %v160 = vld [vmem:[%s149] sm:$0xff]
        %v161 = vld [vmem:[%s149 + $0x8] sm:$0xff]
        %v162 = vld [vmem:[%s149 + $0x10] sm:$0xff]
        %v163 = vld [vmem:[%s149 + $0x18] sm:$0x3f]
        %v164 = vlaneseq
        %v165 = vshrl.u32 %v164, 7
        %v166 = vadd.s32 %v165, 8
        %v167 = vadd.s32 %v165, 16
        %v168 = vadd.s32 %v165, 24
        %vm169 = vcmp.eq.s32.totalorder %v165, 4
        %vm170 = vcmp.eq.s32.totalorder %v166, 4
        %vm171 = vcmp.eq.s32.totalorder %v167, 4
        %vm172 = vcmp.eq.s32.totalorder %v168, 4
        %vm173 = vcmp.eq.s32.totalorder %v165, 9
        %vm174 = vcmp.eq.s32.totalorder %v166, 9
        %vm175 = vcmp.eq.s32.totalorder %v167, 9
        %vm176 = vcmp.eq.s32.totalorder %v168, 9
        %vm177 = vmor %vm169, %vm173
        %vm178 = vmor %vm170, %vm174
        %vm179 = vmor %vm171, %vm175
        %vm180 = vmor %vm172, %vm176
        %vm181 = vcmp.eq.s32.totalorder %v165, 2
        %vm182 = vcmp.eq.s32.totalorder %v166, 2
        %vm183 = vcmp.eq.s32.totalorder %v167, 2
        %vm184 = vcmp.eq.s32.totalorder %v168, 2
        %vm185 = vcmp.eq.s32.totalorder %v165, 3
        %vm186 = vcmp.eq.s32.totalorder %v166, 3
        %vm187 = vcmp.eq.s32.totalorder %v167, 3
        %vm188 = vcmp.eq.s32.totalorder %v168, 3
        %vm189 = vmor %vm181, %vm185
        %vm190 = vmor %vm182, %vm186
        %vm191 = vmor %vm183, %vm187
        %vm192 = vmor %vm184, %vm188
        %vm193 = vcmp.eq.s32.totalorder %v165, 7
        %vm194 = vcmp.eq.s32.totalorder %v166, 7
        %vm195 = vcmp.eq.s32.totalorder %v167, 7
        %vm196 = vcmp.eq.s32.totalorder %v168, 7
        %vm197 = vmor %vm189, %vm193
        %vm198 = vmor %vm190, %vm194
        %vm199 = vmor %vm191, %vm195
        %vm200 = vmor %vm192, %vm196
        %vm201 = vcmp.eq.s32.totalorder %v165, 8
        %vm202 = vcmp.eq.s32.totalorder %v166, 8
        %vm203 = vcmp.eq.s32.totalorder %v167, 8
        %vm204 = vcmp.eq.s32.totalorder %v168, 8
        %vm205 = vmor %vm197, %vm201
        %vm206 = vmor %vm198, %vm202
        %vm207 = vmor %vm199, %vm203
        %vm208 = vmor %vm200, %vm204
        %vm209 = vcmp.le.s32.totalorder %v165, 8
        %vm210 = vcmp.le.s32.totalorder %v166, 8
        %vm211 = vcmp.le.s32.totalorder %v167, 8
        %vm212 = vcmp.le.s32.totalorder %v168, 8
        %vm213 = vmxor %vm177, 1
        %vm214 = vmxor %vm178, 1
        %vm215 = vmxor %vm179, 1
        %vm216 = vmxor %vm180, 1
        %vm217 = vmand %vm209, %vm213
        %vm218 = vmand %vm210, %vm214
        %vm219 = vmand %vm211, %vm215
        %vm220 = vmand %vm212, %vm216
        %v221 = vsel %vm177, 0.5, 1.0
        %v222 = vsel %vm178, 0.5, 1.0
        %v223 = vsel %vm179, 0.5, 1.0
        %v224 = vsel %vm180, 0.5, 1.0
        %v225 = vsel %vm217, 5.0, %v221
        %v226 = vsel %vm218, 5.0, %v222
        %v227 = vsel %vm219, 5.0, %v223
        %v228 = vsel %vm220, 5.0, %v224
        %v229 = vsel %vm177, 0.5, 0.0
        %v230 = vsel %vm178, 0.5, 0.0
        %v231 = vsel %vm179, 0.5, 0.0
        %v232 = vsel %vm180, 0.5, 0.0
        %vm233 = vcmp.eq.f32.partialorder %v160, 1.0
        %v234 = vsel %vm233, 1, 0
        %v235 = vcvt.s32.f32 %v234
        %v236 = vsub.f32 %v156, %v160
        %v237 = vsub.f32 %v157, %v161
        %v238 = vsub.f32 %v158, %v162
        %v239 = vsub.f32 %v159, %v163
        %vm240 = vcmp.gt.f32.partialorder %v235, 0.0
        %v241 = vsel %vm205, 1, 0
        %v242 = vsel %vm206, 1, 0
        %v243 = vsel %vm207, 1, 0
        %v244 = vsel %vm208, 1, 0
        %vm245 = vcmp.eq.s32.totalorder %v241, 1
        %vm246 = vcmp.eq.s32.totalorder %v242, 1
        %vm247 = vcmp.eq.s32.totalorder %v243, 1
        %vm248 = vcmp.eq.s32.totalorder %v244, 1
        %v249 = vsel %vm240, 1, 0
        %v250 = vlaneseq
        %v251 = vshrl.u32 %v250, 7
        %v252 = vsub.s32 4, %v251
        %v253 = vrot.slane %v249, %v252
        %vm254 = vcmp.eq.s32.totalorder %v253, 1
        %vm255 = vmand %vm245, %vm254
        %vm256 = vmand %vm246, %vm254
        %vm257 = vmand %vm247, %vm254
        %vm258 = vmand %vm248, %vm254
        %v259 = vsel %vm255, %v156, 0.0
        %v260 = vsel %vm256, %v157, 0.0
        %v261 = vsel %vm257, %v158, 0.0
        %v262 = vsel %vm258, %v159, 0.0
        %v263 = vrsqrt.pop %v259
        %v264 = vmul.f32 %v259, %v263
        %vm265 = vcmp.eq.f32.partialorder %v259, inf
        %v266 = vsel %vm265, %v259, %v264
        %vm267 = vcmp.eq.f32.partialorder %v259, 0.0
        %v268 = vand.u32 %v259, 2147483648
        %v269 = vsel %vm267, %v268, %v266
        %v270 = vrsqrt.pop %v260
        %v271 = vmul.f32 %v260, %v270
        %vm272 = vcmp.eq.f32.partialorder %v260, inf
        %v273 = vsel %vm272, %v260, %v271
        %vm274 = vcmp.eq.f32.partialorder %v260, 0.0
        %v275 = vand.u32 %v260, 2147483648
        %v276 = vsel %vm274, %v275, %v273
        %v277 = vrsqrt.pop %v261
        %v278 = vmul.f32 %v261, %v277
        %vm279 = vcmp.eq.f32.partialorder %v261, inf
        %v280 = vsel %vm279, %v261, %v278
        %vm281 = vcmp.eq.f32.partialorder %v261, 0.0
        %v282 = vand.u32 %v261, 2147483648
        %v283 = vsel %vm281, %v282, %v280
        %v284 = vrsqrt.pop %v262
        %v285 = vmul.f32 %v262, %v284
        %vm286 = vcmp.eq.f32.partialorder %v262, inf
        %v287 = vsel %vm286, %v262, %v285
        %vm288 = vcmp.eq.f32.partialorder %v262, 0.0
        %v289 = vand.u32 %v262, 2147483648
        %v290 = vsel %vm288, %v289, %v287
        %v291 = vsel %vm255, %v160, 0.0
        %v292 = vsel %vm256, %v161, 0.0
        %v293 = vsel %vm257, %v162, 0.0
        %v294 = vsel %vm258, %v163, 0.0
        %v295 = vrsqrt.pop %v291
        %v296 = vmul.f32 %v291, %v295
        %vm297 = vcmp.eq.f32.partialorder %v291, inf
        %v298 = vsel %vm297, %v291, %v296
        %vm299 = vcmp.eq.f32.partialorder %v291, 0.0
        %v300 = vand.u32 %v291, 2147483648
        %v301 = vsel %vm299, %v300, %v298
        %v302 = vrsqrt.pop %v292
        %v303 = vmul.f32 %v292, %v302
        %vm304 = vcmp.eq.f32.partialorder %v292, inf
        %v305 = vsel %vm304, %v292, %v303
        %vm306 = vcmp.eq.f32.partialorder %v292, 0.0
        %v307 = vand.u32 %v292, 2147483648
        %v308 = vsel %vm306, %v307, %v305
        %v309 = vrsqrt.pop %v293
        %v310 = vmul.f32 %v293, %v309
        %vm311 = vcmp.eq.f32.partialorder %v293, inf
        %v312 = vsel %vm311, %v293, %v310
        %vm313 = vcmp.eq.f32.partialorder %v293, 0.0
        %v314 = vand.u32 %v293, 2147483648
        %v315 = vsel %vm313, %v314, %v312
        %v316 = vrsqrt.pop %v294
        %v317 = vmul.f32 %v294, %v316
        %vm318 = vcmp.eq.f32.partialorder %v294, inf
        %v319 = vsel %vm318, %v294, %v317
        %vm320 = vcmp.eq.f32.partialorder %v294, 0.0
        %v321 = vand.u32 %v294, 2147483648
        %v322 = vsel %vm320, %v321, %v319
        %v323 = vsub.f32 %v269, %v301
        %v324 = vsub.f32 %v276, %v308
        %v325 = vsub.f32 %v283, %v315
        %v326 = vsub.f32 %v290, %v322
        %v327 = vsel %vm245, %v323, %v236
        %v328 = vsel %vm246, %v324, %v237
        %v329 = vsel %vm247, %v325, %v238
        %v330 = vsel %vm248, %v326, %v239
        %v331 = vlaneseq
        %v332 = vshrl.u32 %v331, 7
        %v333 = vsub.s32 4, %v332
        %v334 = vrot.slane %v235, %v333
        %v335 = vmul.f32 %v334, %v225
        %v336 = vmul.f32 %v334, %v226
        %v337 = vmul.f32 %v334, %v227
        %v338 = vmul.f32 %v334, %v228
        %v339 = vadd.f32 %v229, %v335
        %v340 = vadd.f32 %v230, %v336
        %v341 = vadd.f32 %v231, %v337
        %v342 = vadd.f32 %v232, %v338
        %s343 = sld [smem:[#allocation2]]
        %v344 = vmul.f32 %v327, %v327
        %v345 = vmul.f32 %v328, %v328
        %v346 = vmul.f32 %v329, %v329
        %v347 = vmul.f32 %v330, %v330
        %v348 = vmul.f32 %v344, %v339
        %v349 = vmul.f32 %v345, %v340
        %v350 = vmul.f32 %v346, %v341
        %v351 = vmul.f32 %v347, %v342
        %vm352 = vcmask 523264
        %v353 = vsel %vm352, %v348, 0.0
        %v354 = vsel %vm352, %v349, 0.0
        %v355 = vadd.f32 %v353, %v354
        %v356 = vsel %vm352, %v350, 0.0
        %v357 = vadd.f32 %v355, %v356
        %vm358 = vcmask 521216
        %v359 = vsel %vm358, %v351, 0.0
        %v360 = vadd.f32 %v357, %v359
        %361 = vadd.xlane.f32.xlu0 %v360
        %v362 = vpop.xlane.xlu0 %361
        %v363 = vrot.slane %v362, 4
        %v364 = vadd.f32 %v362, %v363
        %v365 = vrot.slane %v364, 2
        %v366 = vadd.f32 %v364, %v365
        %v367 = vrot.slane %v366, 1
        %v368 = vadd.f32 %v366, %v367
        %s369 = vtos %v368
        %s370 = sadd.f32 %s343, %s369
        %s371 = scalar_lea.smem [#allocation2], 0
        %372 = sst [smem:[%s371]] %s370
        %p373 = scmp.eq.s32.totalorder %s14, 1
        // Predicated region
        $region33: #{tpu_custom_call.1} parent=27 // pred_check
          %p374 = pneg %p373
        $region34: #{tpu_custom_call.1} parent=27 // pred_check_branch
          %376 = sbr.rel (%p374) target = $region36
        $region35: #{tpu_custom_call.1} parent=27 // pred_region
          %s377 = sld [smem:[#allocation2]]
          %v378 = vrcp.pop 2.0
          %s379 = vtos %v378
          %s380 = smul.f32 %s377, %s379
          %381 = sst [smem:[%s371]] %s380
        $region36: #{tpu_custom_call.1} parent=27 // pred_fallthru
          _
        // Predicated region
        $region37: #{tpu_custom_call.1} parent=27 // pred_check
          %p382 = pneg %p79
        $region38: #{tpu_custom_call.1} parent=27 // pred_check_branch
          %384 = sbr.rel (%p382) target = $region40
        $region39: #{tpu_custom_call.1} parent=27 // pred_region
          %s386 = ssub.s32 16, 16
          %387 = vsyncadd [#allocation3], %s386
          %390 = dma.smem_to_hbm [#allocation2], 16, %s2, [#allocation3]
        $region40: #{tpu_custom_call.1} parent=27 // pred_fallthru
          _
        // Predicated region
        $region41: #{tpu_custom_call.1} parent=27 // pred_check
          %p391 = pneg %p79
        $region42: #{tpu_custom_call.1} parent=27 // pred_check_branch
          %393 = sbr.rel (%p391) target = $region44
        $region43: #{tpu_custom_call.1} parent=27 // pred_region
          %394 = dma.done [#allocation3], 16
        $region44: #{tpu_custom_call.1} parent=27 // pred_fallthru
          _
        %395 = sfence
      $region28: #{tpu_custom_call.1} parent=5 // pred_fallthru
        _
      %p396 = scmp.le.s32.totalorder 2, %s9
      // Predicated region
      $region45: #{tpu_custom_call.1} parent=5 // pred_check
        %p397 = pneg %p396
      $region46: #{tpu_custom_call.1} parent=5 // pred_check_branch
        %399 = sbr.rel (%p397) target = $region48
      $region47: #{tpu_custom_call.1} parent=5 // pred_region
        %s400 = ssub.s32 %s9, 2
      $region48: #{tpu_custom_call.1} parent=5 // pred_fallthru
        _
    $region6: #{tpu_custom_call.1} parent=1 // loop_footer
      %s13 = sadd.s32 1, %s9
    $region7: #{tpu_custom_call.1} parent=1 // loop_footer_branch
      %8 = sbr.rel target = $region3
    $region8: #{tpu_custom_call.1} parent=1 // loop_exit
      _
    %401 = vsyncpa [#allocation3], 1
    %s402 = scalar_lea.sflag [#allocation3], 1
    %403 = vsyncpa %s402, 1

</llo_original>
